<compile_context>
chip_gen: v5e
topology: v5e:2x2
jax: 0.10.0
libtpu: 0.0.40
codegen_flags: <defaults>
</compile_context>

<pallas_src>
import jax
import jax.numpy as jnp
from jax import lax
from jax.experimental import pallas as pl
from jax.experimental.pallas import tpu as pltpu


def _round_up(x, m):
    return ((x + m - 1) // m) * m


def _pwconv_t_kernel(x_ref, w_ref, b_ref, o_ref):
    """One (time-tile, batch, cout-tile) grid step.

    x_ref : (1, C_in, T_TILE)     input tile, time on lanes
    w_ref : (C_in, CO_TILE)       weight slab in native PyTorch layout (no transpose)
    b_ref : (CO_TILE, 1) float32  bias column (zeros when bias=False)
    o_ref : (1, CO_TILE, T_TILE)  output tile, time on lanes
    """
    acc = lax.dot_general(
        w_ref[...], x_ref[0],
        dimension_numbers=(((0,), (0,)), ((), ())),   # W[ci,co] . x[ci,t] -> (co, t)
        preferred_element_type=jnp.float32)
    o_ref[0] = (acc + b_ref[...]).astype(o_ref.dtype)


def pointwise_conv1d_transpose(x, weight, bias=None, *, stride=1, padding=0,
                               output_padding=0, t_tile=None, co_tile=None):
    """x: (B, C_in, T); weight: (C_in, C_out, 1) (PyTorch ConvTranspose1d layout);
    bias: (C_out,) or None.

    Returns (B, C_out, T_out) with
    T_out = (T - 1) * stride - 2 * padding + output_padding + 1,
    identical semantics to nn.ConvTranspose1d(C_in, C_out, 1, stride, padding,
    output_padding=output_padding, bias=bias is not None).
    """
    B, C_in, T = x.shape
    C_in_w, C_out, K = weight.shape
    assert K == 1 and C_in_w == C_in
    assert 0 <= output_padding < max(stride, 1), \
        "ConvTranspose1d requires output_padding < stride"

    itemsize = jnp.dtype(x.dtype).itemsize

    # ---- C_out tiling: only split when the resident weight slab would hog VMEM ----
    if co_tile is None:
        if C_in * C_out * itemsize <= (8 << 20):
            co_tile = C_out                      # common case: whole weight resident
        else:
            co_tile = 512                        # multiples of 128 -> legal block shape
            while co_tile > 256 and C_in * co_tile * itemsize > (8 << 20):
                co_tile //= 2
    co_tile = min(co_tile, C_out)
    n_co = pl.cdiv(C_out, co_tile)

    # ---- time tiling: biggest 128-multiple tile that fits a ~16 MiB streaming budget
    # (double-buffered input + output columns); boundary block handled by masking. ----
    if t_tile is None:
        budget = 16 << 20
        per_col = 2 * (C_in + co_tile) * itemsize
        t_tile = max(128, min(8192, (budget // max(per_col, 1)) // 128 * 128))
    T_TILE = min(t_tile, _round_up(T, 128))      # both multiples of 128
    n_t = pl.cdiv(T, T_TILE)

    # ---- weight / bias prep (no HBM transpose of the weight) ----
    w2 = weight[:, :, 0].astype(x.dtype)                      # (C_in, C_out), free squeeze
    b_f32 = (bias if bias is not None
             else jnp.zeros((C_out,), jnp.float32)).reshape(C_out, 1).astype(jnp.float32)

    # ---- grid: put the larger parallel axis first (feeds both v7x TensorCores) ----
    time_major = n_t >= B
    if time_major:
        grid = (n_t, B, n_co)
        x_map = lambda g0, g1, co: (g1, 0, g0)
        o_map = lambda g0, g1, co: (g1, co, g0)
    else:
        grid = (B, n_t, n_co)
        x_map = lambda g0, g1, co: (g0, 0, g1)
        o_map = lambda g0, g1, co: (g0, co, g1)
    w_map = lambda g0, g1, co: (0, co)
    bias_map = lambda g0, g1, co: (co, 0)

    # ---- VMEM limit: cover double-buffered tiles + weight slab, stay under v7x 64 MiB
    vmem_need = (2 * (C_in + co_tile) * T_TILE * itemsize
                 + 2 * C_in * co_tile * itemsize
                 + 2 * co_tile * 128 * 4)                      # bias tile (lane-padded)
    vmem_limit = int(min(64 << 20, max(32 << 20, int(vmem_need * 1.25) + (4 << 20))))

    cost = pl.CostEstimate(
        flops=2 * B * C_in * C_out * T,
        transcendentals=0,
        bytes_accessed=int((B * C_in * T + B * C_out * T + C_in * C_out) * itemsize
                           + C_out * 4))

    y = pl.pallas_call(
        _pwconv_t_kernel,
        out_shape=jax.ShapeDtypeStruct((B, C_out, T), x.dtype),
        grid_spec=pltpu.PrefetchScalarGridSpec(
            num_scalar_prefetch=0,
            grid=grid,
            in_specs=[
                pl.BlockSpec((1, C_in, T_TILE), x_map),
                pl.BlockSpec((C_in, co_tile), w_map),
                pl.BlockSpec((co_tile, 1), bias_map),
            ],
            out_specs=pl.BlockSpec((1, co_tile, T_TILE), o_map),
        ),
        compiler_params=pltpu.CompilerParams(
            dimension_semantics=("parallel", "parallel", "parallel"),
            vmem_limit_bytes=vmem_limit),
        cost_estimate=cost,
    )(x, w2, b_f32)

    if stride == 1 and padding == 0 and output_padding == 0:
        return y                                              # fast path: kernel output is final

    # ---- ConvTranspose1d (K=1) glue: zero-insertion by `stride` (+ output_padding),
    # crop `padding` on both sides. Inserted positions get bias only. Done with a
    # single interleave (concat + free reshape) and one slice -> one output pass. ----
    L_full = (T - 1) * stride + 1 + output_padding
    if stride > 1:
        fill = jnp.broadcast_to(b_f32.reshape(1, C_out, 1, 1).astype(y.dtype),
                                (B, C_out, T, stride - 1))
        full = jnp.concatenate([y[..., None], fill], axis=-1).reshape(B, C_out, T * stride)
        return full[:, :, padding: L_full - padding]
    # stride == 1 (output_padding forced to 0): just crop.
    return y[:, :, padding: T - padding]


def _reference(x, weight, bias, *, stride=1, padding=0, output_padding=0):
    """Pure-JAX transcription of PyTorch ConvTranspose1d (kernel_size=1) semantics."""
    B, C_in, T = x.shape
    C_out = weight.shape[1]
    y = jnp.einsum("bct,cd->bdt", x, weight[:, :, 0])        # (B, C_out, T)
    if stride > 1:
        y = jnp.reshape(
            jnp.concatenate(
                [y[..., None], jnp.zeros(y.shape + (stride - 1,), y.dtype)], axis=-1),
            (B, C_out, T * stride))[:, :, : (T - 1) * stride + 1]
    if output_padding > 0:
        y = jnp.pad(y, ((0, 0), (0, 0), (0, output_padding)))
    if padding > 0:
        y = y[:, :, padding: y.shape[-1] - padding]
    if bias is not None:
        y = y + bias[None, :, None]
    return y


if __name__ == "__main__":
    # Small shapes consistent with the module: (batch, in_channels, time)
    B, C_in, C_out, T = 2, 4, 8, 16

    key = jax.random.PRNGKey(0)
    kx, kw, kb = jax.random.split(key, 3)
    x = jax.random.normal(kx, (B, C_in, T), dtype=jnp.float32)
    # PyTorch ConvTranspose1d weight layout: (in_channels, out_channels, kernel_size=1)
    weight = jax.random.normal(kw, (C_in, C_out, 1), dtype=jnp.float32) * 0.1
    bias = jax.random.normal(kb, (C_out,), dtype=jnp.float32) * 0.1

    # 1) Module defaults: stride=1, padding=0, output_padding=0, bias=True.
    out = pointwise_conv1d_transpose(x, weight, bias)
    out = jax.block_until_ready(out)
    ref = _reference(x, weight, bias)
    assert out.shape == ref.shape == (B, C_out, T)
    assert jnp.allclose(out, ref, atol=1e-5, rtol=1e-5)

    # 2) Non-default stride / padding / output_padding (same kernel, thin glue path).
    out2 = pointwise_conv1d_transpose(x, weight, bias, stride=2, padding=1,
                                      output_padding=1)
    out2 = jax.block_until_ready(out2)
    ref2 = _reference(x, weight, bias, stride=2, padding=1, output_padding=1)
    assert out2.shape == ref2.shape == (B, C_out, (T - 1) * 2 - 2 + 1 + 1)
    assert jnp.allclose(out2, ref2, atol=1e-5, rtol=1e-5)

    # 3) bias=False path.
    out3 = pointwise_conv1d_transpose(x, weight, None)
    out3 = jax.block_until_ready(out3)
    ref3 = _reference(x, weight, None)
    assert jnp.allclose(out3, ref3, atol=1e-5, rtol=1e-5)

    print("KERNEL_OK")
</pallas_src>

<mosaic_0001>
module attributes {stable_mosaic.version = 11 : i64} {
  func.func @_pwconv_t_kernel(%arg0: i32, %arg1: i32, %arg2: i32, %arg3: memref<1x4x128xf32, #tpu.memory_space<vmem>>, %arg4: memref<4x8xf32, #tpu.memory_space<vmem>>, %arg5: memref<8x1xf32, #tpu.memory_space<vmem>>, %arg6: memref<1x8x128xf32, #tpu.memory_space<vmem>>) attributes {dimension_semantics = [#tpu.dimension_semantics<parallel>, #tpu.dimension_semantics<parallel>, #tpu.dimension_semantics<parallel>], iteration_bounds = array<i64: 2, 1, 1>, scalar_prefetch = 0 : i64, scratch_operands = 0 : i64, tpu.core_type = #tpu.core_type<tc>, window_params = [{transform_indices = @transform_0, window_bounds = array<i64: 1, 4, 128>}, {transform_indices = @transform_1, window_bounds = array<i64: 4, 8>}, {transform_indices = @transform_2, window_bounds = array<i64: 8, 1>}, {transform_indices = @transform_3, window_bounds = array<i64: 1, 8, 128>}]} {
    %c0 = arith.constant 0 : index
    %c0_0 = arith.constant 0 : index
    %0 = vector.load %arg4[%c0, %c0_0] : memref<4x8xf32, #tpu.memory_space<vmem>>, vector<4x8xf32>
    %c0_1 = arith.constant 0 : index
    %c0_2 = arith.constant 0 : index
    %c0_3 = arith.constant 0 : index
    %1 = vector.load %arg3[%c0_1, %c0_2, %c0_3] : memref<1x4x128xf32, #tpu.memory_space<vmem>>, vector<1x4x128xf32>
    %2 = vector.shape_cast %1 : vector<1x4x128xf32> to vector<4x128xf32>
    %cst = arith.constant dense<0.000000e+00> : vector<8x128xf32>
    %3 = tpu.matmul %0, %2, %cst {dimension_numbers = #tpu.dot_dimension_numbers<[0], [0], [1], [1], [0, 1, 1, 1], [], []>} : vector<4x8xf32>, vector<4x128xf32>, vector<8x128xf32> -> vector<8x128xf32>
    %c0_4 = arith.constant 0 : index
    %c0_5 = arith.constant 0 : index
    %4 = vector.load %arg5[%c0_4, %c0_5] : memref<8x1xf32, #tpu.memory_space<vmem>>, vector<8x1xf32>
    %5 = vector.broadcast %4 : vector<8x1xf32> to vector<8x128xf32>
    %6 = arith.addf %3, %5 : vector<8x128xf32>
    %c0_6 = arith.constant 0 : index
    %c0_7 = arith.constant 0 : index
    %c0_8 = arith.constant 0 : index
    %7 = vector.load %arg6[%c0_6, %c0_7, %c0_8] : memref<1x8x128xf32, #tpu.memory_space<vmem>>, vector<1x8x128xf32>
    %8 = vector.shape_cast %7 : vector<1x8x128xf32> to vector<8x128xf32>
    %9 = vector.shape_cast %6 : vector<8x128xf32> to vector<1x8x128xf32>
    tpu.vector_store %arg6[%c0_6, %c0_7, %c0_8], %9 {strides = array<i32>} : memref<1x8x128xf32, #tpu.memory_space<vmem>>, vector<1x8x128xf32>,
    return
  }
  func.func @transform_0(%arg0: i32, %arg1: i32, %arg2: i32) -> (i32, i32, i32) {
    %c0_i32 = arith.constant 0 : i32
    %c0_i32_0 = arith.constant 0 : i32
    return %arg0, %c0_i32, %arg1 : i32, i32, i32
  }
  func.func @transform_1(%arg0: i32, %arg1: i32, %arg2: i32) -> (i32, i32) {
    %c0_i32 = arith.constant 0 : i32
    %c0_i32_0 = arith.constant 0 : i32
    return %c0_i32, %arg2 : i32, i32
  }
  func.func @transform_2(%arg0: i32, %arg1: i32, %arg2: i32) -> (i32, i32) {
    %c0_i32 = arith.constant 0 : i32
    %c0_i32_0 = arith.constant 0 : i32
    return %arg2, %c0_i32 : i32, i32
  }
  func.func @transform_3(%arg0: i32, %arg1: i32, %arg2: i32) -> (i32, i32, i32) {
    %c0_i32 = arith.constant 0 : i32
    return %arg0, %arg2, %arg1 : i32, i32, i32
  }
}

</mosaic_0001>

<llo_original>
// kernel: tpu_custom_call.1
$region0: #{tpu_custom_call.1}
  #allocation0 [shape = 'u32[]', space=smem, size = 0x4, offset = 0x4, fixed_abs, tag = 'smem constant byte address 0x4 - core index']
  #allocation1 [shape = 'u32[72,128]{1,0:T(1,128)}', space=vmem, size = 0x9000, scoped, tag = 'internal scratch']
  %s0 = inlined_call_operand.vmem [shape: f32[2,4,16], index: 0, kind: input, shape index: {}]
  %s1 = inlined_call_operand.hbm [shape: f32[4,8], index: 1, kind: input, shape index: {}]
  %s2 = inlined_call_operand.vmem [shape: f32[8,1], index: 2, kind: input, shape index: {}]
  %s3 = inlined_call_operand.hbm [shape: f32[2,8,16], index: 3, kind: output, shape index: {}]
  %s4 = sld [smem:[#allocation0]]
  $region49: #{tpu_custom_call.1} parent=0
    _
  %s6 = ssub.s32 1, %s4
  %s7 = scalar_select 0, %s6, %s4
  $region1: #{tpu_custom_call.1} parent=0
    #allocation2 [shape = 'u8[2048]{0}', space=vmem, size = 0x800, scoped, tag = 'input window, operand 1, single buffered']
    #allocation3 [shape = 's32[2]{0}', space=sflag, size = 0x8, scoped, tag = 'scoped memory for tpu_custom_call.1']
    #allocation4 [shape = 's32[2]{0}', space=sflag, size = 0x8, scoped, tag = 'scoped memory for tpu_custom_call.1']
    #allocation5 [shape = 'u8[8192]{0}', space=vmem, size = 0x2000, scoped, tag = 'output window, operand 0']
    %8 = vsyncpa [#allocation3], 0
    %9 = vsyncpa [#allocation4], 0
    %s10 = scalar_lea.sflag [#allocation4], 1
    %11 = vsyncpa %s10, 0
    loop: start=0, step=1, limit=4
    $region2: #{tpu_custom_call.1} parent=1 // loop_pre_header
      _
    $region3: #{tpu_custom_call.1} parent=1 // loop_header
      %s13 = sphi 0, %s17
      %p14 = scmp.ge.s32.totalorder %s13, 4
      %s20 = sphi 0, %s39
      %s21 = sphi 0, %s35
      %s22 = sphi 0, %s31
      %s23 = sphi 0, %s20
      %s24 = sphi 0, %s21
      %s25 = sphi 0, %s22
      %s26 = sphi 0, %s23
      %s27 = sphi 0, %s24
      %s28 = sphi 0, %s25
      %s44 = sphi 0, %s46
      %s47 = sphi 0, %s44
      %s48 = sphi 0, %s47
      %s64 = sphi 0, %s48
      %s70 = sphi 0, %s72
      %s73 = sphi 0, %s70
      %s74 = sphi 0, %s73
      %s90 = sphi 0, %s74
      %s96 = sphi 0, %s98
      %s99 = sphi 0, %s96
      %s100 = sphi 0, %s99
      %s116 = sphi 0, %s100
      %s126 = sphi 0, %s128
      %s129 = sphi 0, %s126
      %s130 = sphi 0, %s129
      %s146 = sphi 0, %s130
    $region4: #{tpu_custom_call.1} parent=1 // loop_header_branch
      %16 = sbr.rel (%p14) target = $region8
    $region5: #{tpu_custom_call.1} parent=1 // loop_body
      %s18 = ssub.s32 %s13, 1
      %s19 = ssub.s32 %s13, 2
      %s29 = sadd.s32 1, %s22
      %p30 = scmp.ge.s32.totalorder %s29, 1
      %s31 = scalar_select %p30, 0, %s29
      %s32 = sadd.s32 1, %s21
      %s33 = scalar_select %p30, %s32, %s21
      %p34 = scmp.ge.s32.totalorder %s33, 1
      %s35 = scalar_select %p34, 0, %s33
      %s36 = sadd.s32 1, %s20
      %s37 = scalar_select %p34, %s36, %s20
      %p38 = scmp.ge.s32.totalorder %s37, 2
      %s39 = scalar_select %p38, 0, %s37
      %s40 = ssub.s32 %s20, %s39
      %s41 = ssub.s32 %s21, %s35
      %s42 = sor.u32 %s40, %s41
      %p43 = scmp.eq.s32.totalorder %s42, 0
      %s45 = sadd.s32 %s44, 1
      %s46 = scalar_select %p43, %s44, %s45
      %p49 = pneg %p43
      %p50 = scmp.eq.s32.totalorder %s13, 1
      %p51 = por %p49, %p50
      %p52 = scmp.ne.s32.totalorder %s44, %s47
      %p53 = scmp.eq.s32.totalorder %s13, 0
      %p54 = por %p52, %p53
      %p55 = scmp.ne.s32.totalorder %s44, %s47
      %p56 = scmp.eq.s32.totalorder %s18, 1
      %p57 = por %p55, %p56
      %p58 = scmp.ne.s32.totalorder %s47, %s48
      %p59 = scmp.eq.s32.totalorder %s18, 0
      %p60 = por %p58, %p59
      %p61 = scmp.ne.s32.totalorder %s47, %s48
      %p62 = scmp.eq.s32.totalorder %s19, 1
      %p63 = por %p61, %p62
      %p65 = scmp.ne.s32.totalorder %s48, %s64
      %p66 = scmp.eq.s32.totalorder %s19, 0
      %p67 = por %p65, %p66
      %s68 = ssub.s32 %s22, %s31
      %p69 = scmp.eq.s32.totalorder %s68, 0
      %s71 = sadd.s32 %s70, 1
      %s72 = scalar_select %p69, %s70, %s71
      %p75 = pneg %p69
      %p76 = scmp.eq.s32.totalorder %s13, 1
      %p77 = por %p75, %p76
      %p78 = scmp.ne.s32.totalorder %s70, %s73
      %p79 = scmp.eq.s32.totalorder %s13, 0
      %p80 = por %p78, %p79
      %p81 = scmp.ne.s32.totalorder %s70, %s73
      %p82 = scmp.eq.s32.totalorder %s18, 1
      %p83 = por %p81, %p82
      %p84 = scmp.ne.s32.totalorder %s73, %s74
      %p85 = scmp.eq.s32.totalorder %s18, 0
      %p86 = por %p84, %p85
      %p87 = scmp.ne.s32.totalorder %s73, %s74
      %p88 = scmp.eq.s32.totalorder %s19, 1
      %p89 = por %p87, %p88
      %p91 = scmp.ne.s32.totalorder %s74, %s90
      %p92 = scmp.eq.s32.totalorder %s19, 0
      %p93 = por %p91, %p92
      %s94 = ssub.s32 %s22, %s31
      %p95 = scmp.eq.s32.totalorder %s94, 0
      %s97 = sadd.s32 %s96, 1
      %s98 = scalar_select %p95, %s96, %s97
      %p101 = pneg %p95
      %p102 = scmp.eq.s32.totalorder %s13, 1
      %p103 = por %p101, %p102
      %p104 = scmp.ne.s32.totalorder %s96, %s99
      %p105 = scmp.eq.s32.totalorder %s13, 0
      %p106 = por %p104, %p105
      %p107 = scmp.ne.s32.totalorder %s96, %s99
      %p108 = scmp.eq.s32.totalorder %s18, 1
      %p109 = por %p107, %p108
      %p110 = scmp.ne.s32.totalorder %s99, %s100
      %p111 = scmp.eq.s32.totalorder %s18, 0
      %p112 = por %p110, %p111
      %p113 = scmp.ne.s32.totalorder %s99, %s100
      %p114 = scmp.eq.s32.totalorder %s19, 1
      %p115 = por %p113, %p114
      %p117 = scmp.ne.s32.totalorder %s100, %s116
      %p118 = scmp.eq.s32.totalorder %s19, 0
      %p119 = por %p117, %p118
      %s120 = ssub.s32 %s20, %s39
      %s121 = ssub.s32 %s22, %s31
      %s122 = sor.u32 %s120, %s121
      %s123 = ssub.s32 %s21, %s35
      %s124 = sor.u32 %s122, %s123
      %p125 = scmp.eq.s32.totalorder %s124, 0
      %s127 = sadd.s32 %s126, 1
      %s128 = scalar_select %p125, %s126, %s127
      %p131 = pneg %p125
      %p132 = scmp.eq.s32.totalorder %s13, 1
      %p133 = por %p131, %p132
      %p134 = scmp.ne.s32.totalorder %s126, %s129
      %p135 = scmp.eq.s32.totalorder %s13, 0
      %p136 = por %p134, %p135
      %p137 = scmp.ne.s32.totalorder %s126, %s129
      %p138 = scmp.eq.s32.totalorder %s18, 1
      %p139 = por %p137, %p138
      %p140 = scmp.ne.s32.totalorder %s129, %s130
      %p141 = scmp.eq.s32.totalorder %s18, 0
      %p142 = por %p140, %p141
      %p143 = scmp.ne.s32.totalorder %s129, %s130
      %p144 = scmp.eq.s32.totalorder %s19, 1
      %p145 = por %p143, %p144
      %p147 = scmp.ne.s32.totalorder %s130, %s146
      %p148 = scmp.eq.s32.totalorder %s19, 0
      %p149 = por %p147, %p148
      %p150 = scmp.le.s32.totalorder 1, %s13
      %p151 = scmp.lt.s32.totalorder %s13, 3
      %p152 = pnand %p150, %p151
      %p153 = pneg %p152
      // Predicated region
      $region9: #{tpu_custom_call.1} parent=5 // pred_check
        _
      $region10: #{tpu_custom_call.1} parent=5 // pred_check_branch
        %155 = sbr.rel (%p152) target = $region12
      $region11: #{tpu_custom_call.1} parent=5 // pred_region
        %s156 = ssub.s32 %s13, 1
        // Predicated region
        $region13: #{tpu_custom_call.1} parent=11 // pred_check
          %p157 = pneg %p86
        $region14: #{tpu_custom_call.1} parent=11 // pred_check_branch
          %159 = sbr.rel (%p157) target = $region16
        $region15: #{tpu_custom_call.1} parent=11 // pred_region
          %161 = vsyncadd [#allocation3], 0
          %s162 = smul.addr %s25, 4
          %s163 = scalar_lea.hbm %s1, %s162
          %s165 = sshll.u32 %s163, 4
          %s166 = int_to_ptr.hbm [resolvable:$true] %s165
          %s167 = sshll.u32 [#allocation2], 4
          %s168 = int_to_ptr.vmem [resolvable:$true] %s167
          %170 = dma.hbm_to_vmem [thread:$0]  %s166, 64, %s168, [#allocation3]
        $region16: #{tpu_custom_call.1} parent=11 // pred_fallthru
          _
        // Predicated region
        $region17: #{tpu_custom_call.1} parent=11 // pred_check
          %p171 = pneg %p112
        $region18: #{tpu_custom_call.1} parent=11 // pred_check_branch
          %173 = sbr.rel (%p171) target = $region20
        $region19: #{tpu_custom_call.1} parent=11 // pred_region
          %p174 = scmp.lt.s32.totalorder %s25, 0
          %s175 = scalar_select %p174, %s25, 0
          %s176 = smul.addr %s175, 8
          %s177 = scalar_lea.vmem %s2, %s176
        $region20: #{tpu_custom_call.1} parent=11 // pred_fallthru
          _
      $region12: #{tpu_custom_call.1} parent=5 // pred_fallthru
        _
      %p178 = scmp.lt.s32.totalorder %s13, 2
      // Predicated region
      $region21: #{tpu_custom_call.1} parent=5 // pred_check
        %p179 = pneg %p178
      $region22: #{tpu_custom_call.1} parent=5 // pred_check_branch
        %181 = sbr.rel (%p179) target = $region24
      $region23: #{tpu_custom_call.1} parent=5 // pred_region
        // Predicated region
        $region25: #{tpu_custom_call.1} parent=23 // pred_check
          %p182 = pneg %p54
        $region26: #{tpu_custom_call.1} parent=23 // pred_check_branch
          %184 = sbr.rel (%p182) target = $region28
        $region27: #{tpu_custom_call.1} parent=23 // pred_region
          %p185 = scmp.lt.s32.totalorder %s20, 1
          %s186 = scalar_select %p185, %s20, 1
          %p187 = scmp.lt.s32.totalorder %s21, 0
          %s188 = scalar_select %p187, %s21, 0
          %s189 = sadd.s32 %s188, %s186
          %s190 = smul.addr %s189, 4
          %s191 = scalar_lea.vmem %s0, %s190
        $region28: #{tpu_custom_call.1} parent=23 // pred_fallthru
          _
      $region24: #{tpu_custom_call.1} parent=5 // pred_fallthru
        _
      %p192 = scmp.le.s32.totalorder 1, %s13
      %p193 = scmp.lt.s32.totalorder %s13, 3
      %p194 = pnand %p192, %p193
      %p195 = pneg %p194
      // Predicated region
      $region29: #{tpu_custom_call.1} parent=5 // pred_check
        _
      $region30: #{tpu_custom_call.1} parent=5 // pred_check_branch
        %197 = sbr.rel (%p194) target = $region32
      $region31: #{tpu_custom_call.1} parent=5 // pred_region
        %s198 = ssub.s32 %s13, 1
        // Predicated region
        $region33: #{tpu_custom_call.1} parent=31 // pred_check
          %p199 = pneg %p86
        $region34: #{tpu_custom_call.1} parent=31 // pred_check_branch
          %201 = sbr.rel (%p199) target = $region36
        $region35: #{tpu_custom_call.1} parent=31 // pred_region
          %203 = dma.done [#allocation3], 64
        $region36: #{tpu_custom_call.1} parent=31 // pred_fallthru
          _
        %p204 = scmp.lt.s32.totalorder %s23, 1
        %s205 = scalar_select %p204, %s23, 1
        %p206 = scmp.lt.s32.totalorder %s24, 0
        %s207 = scalar_select %p206, %s24, 0
        %s208 = sadd.s32 %s207, %s205
        %s209 = smul.addr %s208, 4
        %s210 = scalar_lea.vmem %s0, %s209
        %p211 = pneg %p60
        %p212 = pneg %p57
        %p213 = pneg %p86
        %p214 = pneg %p83
        %p215 = scmp.lt.s32.totalorder %s25, 0
        %s216 = scalar_select %p215, %s25, 0
        %s217 = smul.addr %s216, 8
        %s218 = scalar_lea.vmem %s2, %s217
        %p219 = pneg %p112
        %p220 = pneg %p109
        %p221 = pneg %p142
        %p222 = pneg %p139
        %s223 = sand.u32 %s129, 1
        %s224 = scalar_lea.sflag [#allocation4], %s223
        %s225 = sand.u32 %s129, 1
        %s226 = smul.addr %s225, 8
        %s227 = scalar_lea.vmem [#allocation5], %s226
        %p228 = scmp.lt.s32.totalorder %s23, 1
        %s229 = scalar_select %p228, %s23, 1
        %p230 = scmp.lt.s32.totalorder %s24, 0
        %s231 = scalar_select %p230, %s24, 0
        %s232 = sadd.s32 %s231, %s229
        %s233 = smul.addr %s232, 4
        %s234 = scalar_lea.vmem %s0, %s233
        %p235 = scmp.lt.s32.totalorder %s25, 0
        %s236 = scalar_select %p235, %s25, 0
        %s237 = smul.addr %s236, 8
        %s238 = scalar_lea.vmem %s2, %s237
        %v239 = vld [vmem:[#allocation2] sm:$0xf]
        %v240 = vld [vmem:[%s234] sm:$0xf]
        %v241 = vld [vmem:[%s238] sm:$0xff]
        %243 = vset.pattern.permute.xlu0 0
        %244 = vperm.xlu0 %243, %v241
        %v245 = vpop.permute.xlu0 %244
        %247 = vxpose.xlu0.b32.start [1/16] %v239, 128
        %248 = vxpose.xlu0.b32.cont [2/16] 0.0, 128
        %249 = vxpose.xlu0.b32.cont [3/16] 0.0, 128
        %250 = vxpose.xlu0.b32.cont [4/16] 0.0, 128
        %251 = vxpose.xlu0.b32.cont [5/16] 0.0, 128
        %252 = vxpose.xlu0.b32.cont [6/16] 0.0, 128
        %253 = vxpose.xlu0.b32.cont [7/16] 0.0, 128
        %254 = vxpose.xlu0.b32.cont [8/16] 0.0, 128
        %255 = vxpose.xlu0.b32.cont [9/16] 0.0, 128
        %256 = vxpose.xlu0.b32.cont [10/16] 0.0, 128
        %257 = vxpose.xlu0.b32.cont [11/16] 0.0, 128
        %258 = vxpose.xlu0.b32.cont [12/16] 0.0, 128
        %259 = vxpose.xlu0.b32.cont [13/16] 0.0, 128
        %260 = vxpose.xlu0.b32.cont [14/16] 0.0, 128
        %261 = vxpose.xlu0.b32.cont [15/16] 0.0, 128
        %262 = vxpose.xlu0.b32.end [16/16] 0.0, 128
        %v263 = vpop.trf.xlu0
        %v264 = vpop.trf.xlu0
        %v265 = vpop.trf.xlu0
        %v266 = vpop.trf.xlu0
        %v267 = vpop.trf.xlu0
        %v268 = vpop.trf.xlu0
        %v269 = vpop.trf.xlu0
        %v270 = vpop.trf.xlu0
        %v271 = vpop.trf.xlu0
        %v272 = vpop.trf.xlu0
        %v273 = vpop.trf.xlu0
        %v274 = vpop.trf.xlu0
        %v275 = vpop.trf.xlu0
        %v276 = vpop.trf.xlu0
        %v277 = vpop.trf.xlu0
        %v278 = vpop.trf.xlu0
        %vm279 = vcmask 31744
        %v281 = vsel %vm279, %v263, 0
        %vm283 = vcmask 1043456
        %v285 = vsel %vm283, %v240, 0
        %287 = vmatpush.msra.mxu0 0.0
        %288 = vmatpush.msra.mxu0 0.0
        %289 = vmatpush.msra.mxu0 0.0
        %290 = vmatpush.msra.mxu0 0.0
        %291 = vmatpush.msra.mxu0 0.0
        %292 = vmatpush.msra.mxu0 0.0
        %293 = vmatpush.msra.mxu0 0.0
        %294 = vmatpush.msra.mxu0 0.0
        %295 = vmatpush.msra.mxu0 0.0
        %296 = vmatpush.msra.mxu0 0.0
        %297 = vmatpush.msra.mxu0 0.0
        %298 = vmatpush.msra.mxu0 0.0
        %299 = vmatpush.msra.mxu0 0.0
        %300 = vmatpush.msra.mxu0 0.0
        %301 = vmatpush.msra.mxu0 0.0
        %302 = vmatpush.msra.mxu0 %v285
        %303 = vmatmul.f32.gmra.mxu0 %v281
        %v304 = vpop.f32.mrf.mxu0
        %v305 = vadd.f32 %v245, %v304
        %306 = vdwg.mxu0
        %307 = vst [vmem:[%s227] sm:$0xff] %v305
        %s308 = sand.u32 %s129, 1
        %s309 = scalar_lea.sflag [#allocation4], %s308
        %s310 = sand.u32 %s129, 1
        %s311 = smul.addr %s310, 8
        %s312 = scalar_lea.vmem [#allocation5], %s311
        // Predicated region
        $region37: #{tpu_custom_call.1} parent=31 // pred_check
          %p313 = pneg %p139
        $region38: #{tpu_custom_call.1} parent=31 // pred_check_branch
          %315 = sbr.rel (%p313) target = $region40
        $region39: #{tpu_custom_call.1} parent=31 // pred_region
          %317 = vsyncadd %s309, 0
          %s318 = sadd.s32 %s24, %s25
          %s319 = sadd.s32 %s318, %s23
          %s320 = smul.addr %s319, 8
          %s321 = scalar_lea.hbm %s3, %s320
          %s323 = sshll.u32 %s312, 4
          %s324 = int_to_ptr.vmem [resolvable:$true] %s323
          %s325 = sshll.u32 %s321, 4
          %s326 = int_to_ptr.hbm [resolvable:$true] %s325
          %328 = dma.vmem_to_hbm [thread:$0]  %s324, 128, %s326, %s309
        $region40: #{tpu_custom_call.1} parent=31 // pred_fallthru
          _
      $region32: #{tpu_custom_call.1} parent=5 // pred_fallthru
        _
      %p329 = scmp.le.s32.totalorder 2, %s13
      // Predicated region
      $region41: #{tpu_custom_call.1} parent=5 // pred_check
        %p330 = pneg %p329
      $region42: #{tpu_custom_call.1} parent=5 // pred_check_branch
        %332 = sbr.rel (%p330) target = $region44
      $region43: #{tpu_custom_call.1} parent=5 // pred_region
        %s333 = ssub.s32 %s13, 2
        // Predicated region
        $region45: #{tpu_custom_call.1} parent=43 // pred_check
          %p334 = pneg %p145
        $region46: #{tpu_custom_call.1} parent=43 // pred_check_branch
          %336 = sbr.rel (%p334) target = $region48
        $region47: #{tpu_custom_call.1} parent=43 // pred_region
          %s337 = sand.u32 %s130, 1
          %s338 = scalar_lea.sflag [#allocation4], %s337
          %s339 = sand.u32 %s130, 1
          %s340 = smul.addr %s339, 8
          %s341 = scalar_lea.vmem [#allocation5], %s340
          %343 = dma.done %s338, 128
        $region48: #{tpu_custom_call.1} parent=43 // pred_fallthru
          _
      $region44: #{tpu_custom_call.1} parent=5 // pred_fallthru
        _
    $region6: #{tpu_custom_call.1} parent=1 // loop_footer
      %s17 = sadd.s32 1, %s13
    $region7: #{tpu_custom_call.1} parent=1 // loop_footer_branch
      %12 = sbr.rel target = $region3
    $region8: #{tpu_custom_call.1} parent=1 // loop_exit
      _
    %344 = vsyncpa [#allocation3], 1
    %s345 = scalar_lea.sflag [#allocation3], 1
    %346 = vsyncpa %s345, 1
    %347 = vsyncpa [#allocation4], 1
    %s348 = scalar_lea.sflag [#allocation4], 1
    %349 = vsyncpa %s348, 1

</llo_original>
